<compile_context>
chip_gen: v5e
topology: v5e:2x2
jax: 0.10.0
libtpu: 0.0.40
codegen_flags: <defaults>
</compile_context>

<pallas_src>
import functools

import jax
import jax.numpy as jnp
from jax import lax
from jax.experimental import pallas as pl
from jax.experimental.pallas import tpu as pltpu


_OUT_PAD = 128  # lane-dense output width; real topk columns live in [:, :topk]


def _gate_kernel(x_ref, wt_ref, w_out_ref, idx_out_ref, *,
                 n_experts, topk, score_func, route_scale, mxu_dtype):
    """One token tile: router logits -> softmax/sigmoid -> top-k weights+indices."""
    tm = x_ref.shape[0]
    e_pad = wt_ref.shape[1]
    out_pad = w_out_ref.shape[1]

    # bf16 MXU operands, f32 accumulation (mxu_dtype flag-gates exact f32 mode).
    x = x_ref[...].astype(mxu_dtype)                             # [tm, dim]
    wt = wt_ref[...].astype(mxu_dtype)                           # [dim, E_pad]
    logits = jnp.dot(x, wt, preferred_element_type=jnp.float32)  # [tm, E_pad] f32

    neg_inf = jnp.float32(-jnp.inf)
    # Single f32 column iota (used for masking, argmax tie-break and updates).
    colf = lax.broadcasted_iota(jnp.int32, (tm, e_pad), 1).astype(jnp.float32)

    pad_experts = (e_pad != n_experts)
    if pad_experts:  # trace-time: skipped entirely when E is a multiple of 128
        logits = jnp.where(colf < n_experts, logits, neg_inf)

    if score_func == "softmax":
        # Deferred normalization: select on the unnormalized exp() values
        # (same ordering), divide only the selected columns at the end.
        m = jnp.max(logits, axis=-1, keepdims=True)
        sel = jnp.exp(logits - m)                                # padded -> 0
        denom = jnp.sum(sel, axis=-1, keepdims=True)             # [tm, 1]
        if pad_experts:
            sel = jnp.where(colf < n_experts, sel, neg_inf)
    else:  # "sigmoid"
        sel = jax.nn.sigmoid(logits)                             # padded -> 0
        if pad_experts:
            sel = jnp.where(colf < n_experts, sel, neg_inf)
        denom = None

    # Iterative top-k (k small & static): max -> first-argmax -> mask out.
    big = jnp.float32(e_pad)
    w_cols, i_cols = [], []
    for _ in range(topk):
        mx = jnp.max(sel, axis=-1, keepdims=True)                         # [tm, 1]
        idxf = jnp.min(jnp.where(sel == mx, colf, big),
                       axis=-1, keepdims=True)                            # first max
        w_cols.append(mx)
        i_cols.append(idxf)
        sel = jnp.where(colf == idxf, neg_inf, sel)

    # Lane-dense output slabs: pad the topk columns with zeros up to out_pad.
    pad_cols = out_pad - topk
    if pad_cols:
        zeros = jnp.zeros((tm, pad_cols), jnp.float32)
        w_cols.append(zeros)
        i_cols.append(zeros)
    weights = jnp.concatenate(w_cols, axis=-1)                   # [tm, out_pad]
    indices_f = jnp.concatenate(i_cols, axis=-1)                 # [tm, out_pad]

    if score_func == "softmax":
        weights = weights / denom                 # zero pad columns stay zero
    else:
        # renormalize selected sigmoid probs (pad columns contribute 0 to sum)
        weights = weights / jnp.sum(weights, axis=-1, keepdims=True)
    if route_scale != 1.0:
        weights = weights * jnp.float32(route_scale)

    w_out_ref[...] = weights.astype(w_out_ref.dtype)
    idx_out_ref[...] = indices_f.astype(jnp.int32)


def prepare_gate_weight(weight, dtype=jnp.bfloat16):
    """One-time prep: [E, dim] (PyTorch layout) -> [dim, E_pad] MXU-ready weight.

    Do this once at model load so no per-forward transpose/pad copy is paid.
    """
    E, dim = weight.shape
    e_pad = pl.cdiv(E, 128) * 128
    wt = jnp.asarray(weight, dtype).T                            # [dim, E]
    if e_pad != E:
        wt = jnp.pad(wt, ((0, 0), (0, e_pad - E)))               # masked in-kernel
    return wt


def _vmem_capacity_bytes(default=64 * 1024 * 1024):
    try:
        info = pltpu.get_tpu_info()
        return int(getattr(info, "vmem_capacity_bytes", default))
    except Exception:
        return default


def gate_forward(x, wt_padded, n_experts, *, topk=6, score_func="softmax",
                 route_scale=1.0, tm=None, mxu_dtype=jnp.bfloat16):
    """
    x         : [N, dim]  (native dtype — NOT up-cast or padded here)
    wt_padded : [dim, E_pad] from prepare_gate_weight()
    returns (weights [N, topk] in x.dtype, indices [N, topk] int32)
    """
    N, dim = x.shape
    dim_w, e_pad = wt_padded.shape
    assert dim == dim_w and e_pad % 128 == 0
    assert topk <= n_experts <= e_pad

    vmem_cap = _vmem_capacity_bytes()
    if tm is None:
        # 512-token tiles on 128-MiB-VMEM chips (v5e/v6e); 256 on v7x (64 MiB).
        tm = 512 if vmem_cap >= 100 * 1024 * 1024 else 256

    # Token tile: multiple of 8, no bigger than needed, and keep >= 2 grid
    # steps so the "parallel" axis can be split across v7x's 2 TensorCores.
    tm_eff = min(tm, ((N + 7) // 8) * 8)
    if N > 8:
        tm_eff = min(tm_eff, ((pl.cdiv(N, 2) + 7) // 8) * 8)
    tm_eff = max(tm_eff, 8)

    n_blocks = pl.cdiv(N, tm_eff)
    n_out = n_blocks * tm_eff
    out_pad = _OUT_PAD if topk <= _OUT_PAD else pl.cdiv(topk, 128) * 128

    kernel = functools.partial(
        _gate_kernel, n_experts=n_experts, topk=topk, score_func=score_func,
        route_scale=route_scale, mxu_dtype=mxu_dtype)

    # VMEM budget from actual tile sizes (double-buffered x & outputs, weight
    # counted twice as a worst case, generous headroom for [tm, E_pad] temps).
    x_bytes = 2 * tm_eff * dim * x.dtype.itemsize
    w_bytes = 2 * dim * e_pad * wt_padded.dtype.itemsize
    o_bytes = 2 * tm_eff * out_pad * (x.dtype.itemsize + 4)
    tmp_bytes = 24 * tm_eff * e_pad * 4
    vmem_limit = x_bytes + w_bytes + o_bytes + tmp_bytes + (4 << 20)
    vmem_limit = int(min(max(vmem_limit, 16 << 20), vmem_cap))

    def _run(single_buffer_weight):
        w_kwargs = ({"pipeline_mode": pl.Buffered(1)}
                    if single_buffer_weight else {})
        return pl.pallas_call(
            kernel,
            out_shape=(jax.ShapeDtypeStruct((n_out, out_pad), x.dtype),
                       jax.ShapeDtypeStruct((n_out, out_pad), jnp.int32)),
            grid_spec=pltpu.PrefetchScalarGridSpec(
                num_scalar_prefetch=0,
                grid=(n_blocks,),
                in_specs=[
                    pl.BlockSpec((tm_eff, dim), lambda i: (i, 0)),   # x tile
                    pl.BlockSpec((dim, e_pad), lambda i: (0, 0),     # resident W^T
                                 **w_kwargs),
                ],
                out_specs=(pl.BlockSpec((tm_eff, out_pad), lambda i: (i, 0)),
                           pl.BlockSpec((tm_eff, out_pad), lambda i: (i, 0))),
            ),
            compiler_params=pltpu.CompilerParams(
                dimension_semantics=("parallel",),
                vmem_limit_bytes=vmem_limit),
        )(x, wt_padded)

    try:
        weights, indices = _run(True)       # single-buffered constant weight
    except Exception:
        weights, indices = _run(False)      # fallback: default double-buffering

    return weights[:N, :topk], indices[:N, :topk]


def gate_reference(x, weight, *, topk=6, score_func="softmax", route_scale=1.0,
                   mxu_dtype=jnp.bfloat16):
    """Pure-JAX reference mirroring PyTorch Gate.forward (defaults path),
    with the same bf16-operand / f32-accumulate matmul as the kernel."""
    scores = jnp.dot(x.astype(mxu_dtype), weight.astype(mxu_dtype).T,
                     preferred_element_type=jnp.float32)
    if score_func == "softmax":
        s = jax.nn.softmax(scores, axis=-1)
    else:
        s = jax.nn.sigmoid(scores)
    vals, idx = jax.lax.top_k(s, topk)
    w = vals
    if score_func == "sigmoid":
        w = w / jnp.sum(w, axis=-1, keepdims=True)
    w = w * route_scale
    return w.astype(x.dtype), idx


if __name__ == "__main__":
    # Small shapes consistent with ModelArgs defaults:
    # 16 tokens, dim=128, 64 routed experts, top-6 activated, softmax scoring.
    N, dim, n_experts, topk = 16, 128, 64, 6

    key = jax.random.PRNGKey(0)
    kx, kw = jax.random.split(key)
    x = jax.random.normal(kx, (N, dim), jnp.float32)
    weight = jax.random.normal(kw, (n_experts, dim), jnp.float32) * (dim ** -0.5)

    # Weight transpose/pad hoisted out of the per-call path (done once).
    wt = prepare_gate_weight(weight, dtype=jnp.bfloat16)

    # softmax scoring path (ModelArgs default)
    w_out, i_out = gate_forward(x, wt, n_experts, topk=topk,
                                score_func="softmax", route_scale=1.0)
    w_out = jax.block_until_ready(w_out)
    i_out = jax.block_until_ready(i_out)

    w_ref, i_ref = gate_reference(x, weight, topk=topk, score_func="softmax",
                                  route_scale=1.0)
    assert w_out.shape == (N, topk) and i_out.shape == (N, topk)
    assert jnp.array_equal(i_out, i_ref)
    assert jnp.allclose(w_out, w_ref, atol=2e-5, rtol=2e-5), \
        float(jnp.abs(w_out - w_ref).max())

    # sigmoid scoring path (exercises the renormalization branch)
    w_s, i_s = gate_forward(x, wt, n_experts, topk=topk,
                            score_func="sigmoid", route_scale=1.0)
    w_s = jax.block_until_ready(w_s)
    w_sr, i_sr = gate_reference(x, weight, topk=topk, score_func="sigmoid",
                                route_scale=1.0)
    assert jnp.array_equal(i_s, i_sr)
    assert jnp.allclose(w_s, w_sr, atol=2e-5, rtol=2e-5), \
        float(jnp.abs(w_s - w_sr).max())

    print("KERNEL_OK")
</pallas_src>

<mosaic_0001>
module attributes {stable_mosaic.version = 11 : i64} {
  func.func @_gate_kernel(%arg0: i32, %arg1: memref<8x128xf32, #tpu.memory_space<vmem>>, %arg2: memref<128x128xbf16, #tpu.memory_space<vmem>>, %arg3: memref<8x128xf32, #tpu.memory_space<vmem>>, %arg4: memref<8x128xi32, #tpu.memory_space<vmem>>) attributes {dimension_semantics = [#tpu.dimension_semantics<parallel>], iteration_bounds = array<i64: 2>, scalar_prefetch = 0 : i64, scratch_operands = 0 : i64, tpu.core_type = #tpu.core_type<tc>, window_params = [{transform_indices = @transform_0, window_bounds = array<i64: 8, 128>}, {pipeline_mode = #tpu.pipeline_mode<synchronous>, transform_indices = @transform_1, window_bounds = array<i64: 128, 128>}, {transform_indices = @transform_2, window_bounds = array<i64: 8, 128>}, {transform_indices = @transform_3, window_bounds = array<i64: 8, 128>}]} {
    %c0 = arith.constant 0 : index
    %c0_0 = arith.constant 0 : index
    %0 = vector.load %arg1[%c0, %c0_0] : memref<8x128xf32, #tpu.memory_space<vmem>>, vector<8x128xf32>
    %1 = arith.truncf %0 : vector<8x128xf32> to vector<8x128xbf16>
    %c0_1 = arith.constant 0 : index
    %c0_2 = arith.constant 0 : index
    %2 = vector.load %arg2[%c0_1, %c0_2] : memref<128x128xbf16, #tpu.memory_space<vmem>>, vector<128x128xbf16>
    %cst = arith.constant dense<0.000000e+00> : vector<8x128xf32>
    %3 = tpu.matmul %1, %2, %cst {dimension_numbers = #tpu.dot_dimension_numbers<[1], [0], [0], [1], [0, 0, 1, 1], [], []>} : vector<8x128xbf16>, vector<128x128xbf16>, vector<8x128xf32> -> vector<8x128xf32>
    %4 = tpu.iota {dimensions = array<i32: 1>} : vector<8x128xi32>
    %5 = arith.sitofp %4 : vector<8x128xi32> to vector<8x128xf32>
    %cst_3 = arith.constant 6.400000e+01 : f32
    %6 = vector.broadcast %cst_3 : f32 to vector<8x128xf32>
    %7 = arith.cmpf olt, %5, %6 : vector<8x128xf32>
    %cst_4 = arith.constant 0xFF800000 : f32
    %8 = vector.broadcast %cst_4 : f32 to vector<8x128xf32>
    %9 = arith.select %7, %3, %8 : vector<8x128xi1>, vector<8x128xf32>
    %cst_5 = arith.constant dense<0xFF800000> : vector<8xf32>
    %10 = vector.multi_reduction <maximumf>, %9, %cst_5 [1] : vector<8x128xf32> to vector<8xf32>
    %11 = vector.shape_cast %10 : vector<8xf32> to vector<8x1xf32>
    %12 = vector.broadcast %11 : vector<8x1xf32> to vector<8x128xf32>
    %13 = arith.subf %9, %12 : vector<8x128xf32>
    %14 = math.exp %13 : vector<8x128xf32>
    %cst_6 = arith.constant dense<0.000000e+00> : vector<8xf32>
    %15 = vector.multi_reduction <add>, %14, %cst_6 [1] : vector<8x128xf32> to vector<8xf32>
    %16 = vector.shape_cast %15 : vector<8xf32> to vector<8x1xf32>
    %cst_7 = arith.constant 6.400000e+01 : f32
    %17 = vector.broadcast %cst_7 : f32 to vector<8x128xf32>
    %18 = arith.cmpf olt, %5, %17 : vector<8x128xf32>
    %cst_8 = arith.constant 0xFF800000 : f32
    %19 = vector.broadcast %cst_8 : f32 to vector<8x128xf32>
    %20 = arith.select %18, %14, %19 : vector<8x128xi1>, vector<8x128xf32>
    %cst_9 = arith.constant dense<0xFF800000> : vector<8xf32>
    %21 = vector.multi_reduction <maximumf>, %20, %cst_9 [1] : vector<8x128xf32> to vector<8xf32>
    %22 = vector.shape_cast %21 : vector<8xf32> to vector<8x1xf32>
    %23 = vector.broadcast %22 : vector<8x1xf32> to vector<8x128xf32>
    %24 = arith.cmpf oeq, %20, %23 : vector<8x128xf32>
    %cst_10 = arith.constant 1.280000e+02 : f32
    %25 = vector.broadcast %cst_10 : f32 to vector<8x128xf32>
    %26 = arith.select %24, %5, %25 : vector<8x128xi1>, vector<8x128xf32>
    %cst_11 = arith.constant dense<0x7F800000> : vector<8xf32>
    %27 = vector.multi_reduction <minimumf>, %26, %cst_11 [1] : vector<8x128xf32> to vector<8xf32>
    %28 = vector.shape_cast %27 : vector<8xf32> to vector<8x1xf32>
    %29 = vector.broadcast %28 : vector<8x1xf32> to vector<8x128xf32>
    %30 = arith.cmpf oeq, %5, %29 : vector<8x128xf32>
    %cst_12 = arith.constant 0xFF800000 : f32
    %31 = vector.broadcast %cst_12 : f32 to vector<8x128xf32>
    %32 = arith.select %30, %31, %20 : vector<8x128xi1>, vector<8x128xf32>
    %cst_13 = arith.constant dense<0xFF800000> : vector<8xf32>
    %33 = vector.multi_reduction <maximumf>, %32, %cst_13 [1] : vector<8x128xf32> to vector<8xf32>
    %34 = vector.shape_cast %33 : vector<8xf32> to vector<8x1xf32>
    %35 = vector.broadcast %34 : vector<8x1xf32> to vector<8x128xf32>
    %36 = arith.cmpf oeq, %32, %35 : vector<8x128xf32>
    %cst_14 = arith.constant 1.280000e+02 : f32
    %37 = vector.broadcast %cst_14 : f32 to vector<8x128xf32>
    %38 = arith.select %36, %5, %37 : vector<8x128xi1>, vector<8x128xf32>
    %cst_15 = arith.constant dense<0x7F800000> : vector<8xf32>
    %39 = vector.multi_reduction <minimumf>, %38, %cst_15 [1] : vector<8x128xf32> to vector<8xf32>
    %40 = vector.shape_cast %39 : vector<8xf32> to vector<8x1xf32>
    %41 = vector.broadcast %40 : vector<8x1xf32> to vector<8x128xf32>
    %42 = arith.cmpf oeq, %5, %41 : vector<8x128xf32>
    %cst_16 = arith.constant 0xFF800000 : f32
    %43 = vector.broadcast %cst_16 : f32 to vector<8x128xf32>
    %44 = arith.select %42, %43, %32 : vector<8x128xi1>, vector<8x128xf32>
    %cst_17 = arith.constant dense<0xFF800000> : vector<8xf32>
    %45 = vector.multi_reduction <maximumf>, %44, %cst_17 [1] : vector<8x128xf32> to vector<8xf32>
    %46 = vector.shape_cast %45 : vector<8xf32> to vector<8x1xf32>
    %47 = vector.broadcast %46 : vector<8x1xf32> to vector<8x128xf32>
    %48 = arith.cmpf oeq, %44, %47 : vector<8x128xf32>
    %cst_18 = arith.constant 1.280000e+02 : f32
    %49 = vector.broadcast %cst_18 : f32 to vector<8x128xf32>
    %50 = arith.select %48, %5, %49 : vector<8x128xi1>, vector<8x128xf32>
    %cst_19 = arith.constant dense<0x7F800000> : vector<8xf32>
    %51 = vector.multi_reduction <minimumf>, %50, %cst_19 [1] : vector<8x128xf32> to vector<8xf32>
    %52 = vector.shape_cast %51 : vector<8xf32> to vector<8x1xf32>
    %53 = vector.broadcast %52 : vector<8x1xf32> to vector<8x128xf32>
    %54 = arith.cmpf oeq, %5, %53 : vector<8x128xf32>
    %cst_20 = arith.constant 0xFF800000 : f32
    %55 = vector.broadcast %cst_20 : f32 to vector<8x128xf32>
    %56 = arith.select %54, %55, %44 : vector<8x128xi1>, vector<8x128xf32>
    %cst_21 = arith.constant dense<0xFF800000> : vector<8xf32>
    %57 = vector.multi_reduction <maximumf>, %56, %cst_21 [1] : vector<8x128xf32> to vector<8xf32>
    %58 = vector.shape_cast %57 : vector<8xf32> to vector<8x1xf32>
    %59 = vector.broadcast %58 : vector<8x1xf32> to vector<8x128xf32>
    %60 = arith.cmpf oeq, %56, %59 : vector<8x128xf32>
    %cst_22 = arith.constant 1.280000e+02 : f32
    %61 = vector.broadcast %cst_22 : f32 to vector<8x128xf32>
    %62 = arith.select %60, %5, %61 : vector<8x128xi1>, vector<8x128xf32>
    %cst_23 = arith.constant dense<0x7F800000> : vector<8xf32>
    %63 = vector.multi_reduction <minimumf>, %62, %cst_23 [1] : vector<8x128xf32> to vector<8xf32>
    %64 = vector.shape_cast %63 : vector<8xf32> to vector<8x1xf32>
    %65 = vector.broadcast %64 : vector<8x1xf32> to vector<8x128xf32>
    %66 = arith.cmpf oeq, %5, %65 : vector<8x128xf32>
    %cst_24 = arith.constant 0xFF800000 : f32
    %67 = vector.broadcast %cst_24 : f32 to vector<8x128xf32>
    %68 = arith.select %66, %67, %56 : vector<8x128xi1>, vector<8x128xf32>
    %cst_25 = arith.constant dense<0xFF800000> : vector<8xf32>
    %69 = vector.multi_reduction <maximumf>, %68, %cst_25 [1] : vector<8x128xf32> to vector<8xf32>
    %70 = vector.shape_cast %69 : vector<8xf32> to vector<8x1xf32>
    %71 = vector.broadcast %70 : vector<8x1xf32> to vector<8x128xf32>
    %72 = arith.cmpf oeq, %68, %71 : vector<8x128xf32>
    %cst_26 = arith.constant 1.280000e+02 : f32
    %73 = vector.broadcast %cst_26 : f32 to vector<8x128xf32>
    %74 = arith.select %72, %5, %73 : vector<8x128xi1>, vector<8x128xf32>
    %cst_27 = arith.constant dense<0x7F800000> : vector<8xf32>
    %75 = vector.multi_reduction <minimumf>, %74, %cst_27 [1] : vector<8x128xf32> to vector<8xf32>
    %76 = vector.shape_cast %75 : vector<8xf32> to vector<8x1xf32>
    %77 = vector.broadcast %76 : vector<8x1xf32> to vector<8x128xf32>
    %78 = arith.cmpf oeq, %5, %77 : vector<8x128xf32>
    %cst_28 = arith.constant 0xFF800000 : f32
    %79 = vector.broadcast %cst_28 : f32 to vector<8x128xf32>
    %80 = arith.select %78, %79, %68 : vector<8x128xi1>, vector<8x128xf32>
    %cst_29 = arith.constant dense<0xFF800000> : vector<8xf32>
    %81 = vector.multi_reduction <maximumf>, %80, %cst_29 [1] : vector<8x128xf32> to vector<8xf32>
    %82 = vector.shape_cast %81 : vector<8xf32> to vector<8x1xf32>
    %83 = vector.broadcast %82 : vector<8x1xf32> to vector<8x128xf32>
    %84 = arith.cmpf oeq, %80, %83 : vector<8x128xf32>
    %cst_30 = arith.constant 1.280000e+02 : f32
    %85 = vector.broadcast %cst_30 : f32 to vector<8x128xf32>
    %86 = arith.select %84, %5, %85 : vector<8x128xi1>, vector<8x128xf32>
    %cst_31 = arith.constant dense<0x7F800000> : vector<8xf32>
    %87 = vector.multi_reduction <minimumf>, %86, %cst_31 [1] : vector<8x128xf32> to vector<8xf32>
    %88 = vector.shape_cast %87 : vector<8xf32> to vector<8x1xf32>
    %cst_32 = arith.constant 0.000000e+00 : f32
    %89 = vector.broadcast %cst_32 : f32 to vector<8x122xf32>
    %90 = tpu.concatenate %22, %34, %46, %58, %70, %82, %89 in 1 : vector<8x1xf32>, vector<8x1xf32>, vector<8x1xf32>, vector<8x1xf32>, vector<8x1xf32>, vector<8x1xf32>, vector<8x122xf32> -> vector<8x128xf32>
    %91 = tpu.concatenate %28, %40, %52, %64, %76, %88, %89 in 1 : vector<8x1xf32>, vector<8x1xf32>, vector<8x1xf32>, vector<8x1xf32>, vector<8x1xf32>, vector<8x1xf32>, vector<8x122xf32> -> vector<8x128xf32>
    %92 = vector.broadcast %16 : vector<8x1xf32> to vector<8x128xf32>
    %93 = arith.divf %90, %92 : vector<8x128xf32>
    %c0_33 = arith.constant 0 : index
    %c0_34 = arith.constant 0 : index
    %94 = vector.load %arg3[%c0_33, %c0_34] : memref<8x128xf32, #tpu.memory_space<vmem>>, vector<8x128xf32>
    tpu.vector_store %arg3[%c0_33, %c0_34], %93 {strides = array<i32>} : memref<8x128xf32, #tpu.memory_space<vmem>>, vector<8x128xf32>,
    %95 = arith.fptosi %91 : vector<8x128xf32> to vector<8x128xi32>
    %c0_35 = arith.constant 0 : index
    %c0_36 = arith.constant 0 : index
    %96 = vector.load %arg4[%c0_35, %c0_36] : memref<8x128xi32, #tpu.memory_space<vmem>>, vector<8x128xi32>
    tpu.vector_store %arg4[%c0_35, %c0_36], %95 {strides = array<i32>} : memref<8x128xi32, #tpu.memory_space<vmem>>, vector<8x128xi32>,
    return
  }
  func.func @transform_0(%arg0: i32) -> (i32, i32) {
    %c0_i32 = arith.constant 0 : i32
    %c0_i32_0 = arith.constant 0 : i32
    return %arg0, %c0_i32 : i32, i32
  }
  func.func @transform_1(%arg0: i32) -> (i32, i32) {
    %c0_i32 = arith.constant 0 : i32
    %c0_i32_0 = arith.constant 0 : i32
    %c0_i32_1 = arith.constant 0 : i32
    return %c0_i32, %c0_i32_0 : i32, i32
  }
  func.func @transform_2(%arg0: i32) -> (i32, i32) {
    %c0_i32 = arith.constant 0 : i32
    %c0_i32_0 = arith.constant 0 : i32
    return %arg0, %c0_i32 : i32, i32
  }
  func.func @transform_3(%arg0: i32) -> (i32, i32) {
    %c0_i32 = arith.constant 0 : i32
    %c0_i32_0 = arith.constant 0 : i32
    return %arg0, %c0_i32 : i32, i32
  }
}

module attributes {stable_mosaic.version = 11 : i64} {
  func.func @_gate_kernel(%arg0: i32, %arg1: memref<8x128xf32, #tpu.memory_space<vmem>>, %arg2: memref<128x128xbf16, #tpu.memory_space<vmem>>, %arg3: memref<8x128xf32, #tpu.memory_space<vmem>>, %arg4: memref<8x128xi32, #tpu.memory_space<vmem>>) attributes {dimension_semantics = [#tpu.dimension_semantics<parallel>], iteration_bounds = array<i64: 2>, scalar_prefetch = 0 : i64, scratch_operands = 0 : i64, tpu.core_type = #tpu.core_type<tc>, window_params = [{transform_indices = @transform_0, window_bounds = array<i64: 8, 128>}, {pipeline_mode = #tpu.pipeline_mode<synchronous>, transform_indices = @transform_1, window_bounds = array<i64: 128, 128>}, {transform_indices = @transform_2, window_bounds = array<i64: 8, 128>}, {transform_indices = @transform_3, window_bounds = array<i64: 8, 128>}]} {
    %c0 = arith.constant 0 : index
    %c0_0 = arith.constant 0 : index
    %0 = vector.load %arg1[%c0, %c0_0] : memref<8x128xf32, #tpu.memory_space<vmem>>, vector<8x128xf32>
    %1 = arith.truncf %0 : vector<8x128xf32> to vector<8x128xbf16>
    %c0_1 = arith.constant 0 : index
    %c0_2 = arith.constant 0 : index
    %2 = vector.load %arg2[%c0_1, %c0_2] : memref<128x128xbf16, #tpu.memory_space<vmem>>, vector<128x128xbf16>
    %cst = arith.constant dense<0.000000e+00> : vector<8x128xf32>
    %3 = tpu.matmul %1, %2, %cst {dimension_numbers = #tpu.dot_dimension_numbers<[1], [0], [0], [1], [0, 0, 1, 1], [], []>} : vector<8x128xbf16>, vector<128x128xbf16>, vector<8x128xf32> -> vector<8x128xf32>
    %4 = tpu.iota {dimensions = array<i32: 1>} : vector<8x128xi32>
    %5 = arith.sitofp %4 : vector<8x128xi32> to vector<8x128xf32>
    %cst_3 = arith.constant 6.400000e+01 : f32
    %6 = vector.broadcast %cst_3 : f32 to vector<8x128xf32>
    %7 = arith.cmpf olt, %5, %6 : vector<8x128xf32>
    %cst_4 = arith.constant 0xFF800000 : f32
    %8 = vector.broadcast %cst_4 : f32 to vector<8x128xf32>
    %9 = arith.select %7, %3, %8 : vector<8x128xi1>, vector<8x128xf32>
    %cst_5 = arith.constant dense<0xFF800000> : vector<8xf32>
    %10 = vector.multi_reduction <maximumf>, %9, %cst_5 [1] : vector<8x128xf32> to vector<8xf32>
    %11 = vector.shape_cast %10 : vector<8xf32> to vector<8x1xf32>
    %12 = vector.broadcast %11 : vector<8x1xf32> to vector<8x128xf32>
    %13 = arith.subf %9, %12 : vector<8x128xf32>
    %14 = math.exp %13 : vector<8x128xf32>
    %cst_6 = arith.constant dense<0.000000e+00> : vector<8xf32>
    %15 = vector.multi_reduction <add>, %14, %cst_6 [1] : vector<8x128xf32> to vector<8xf32>
    %16 = vector.shape_cast %15 : vector<8xf32> to vector<8x1xf32>
    %cst_7 = arith.constant 6.400000e+01 : f32
    %17 = vector.broadcast %cst_7 : f32 to vector<8x128xf32>
    %18 = arith.cmpf olt, %5, %17 : vector<8x128xf32>
    %cst_8 = arith.constant 0xFF800000 : f32
    %19 = vector.broadcast %cst_8 : f32 to vector<8x128xf32>
    %20 = arith.select %18, %14, %19 : vector<8x128xi1>, vector<8x128xf32>
    %cst_9 = arith.constant dense<0xFF800000> : vector<8xf32>
    %21 = vector.multi_reduction <maximumf>, %20, %cst_9 [1] : vector<8x128xf32> to vector<8xf32>
    %22 = vector.shape_cast %21 : vector<8xf32> to vector<8x1xf32>
    %23 = vector.broadcast %22 : vector<8x1xf32> to vector<8x128xf32>
    %24 = arith.cmpf oeq, %20, %23 : vector<8x128xf32>
    %cst_10 = arith.constant 1.280000e+02 : f32
    %25 = vector.broadcast %cst_10 : f32 to vector<8x128xf32>
    %26 = arith.select %24, %5, %25 : vector<8x128xi1>, vector<8x128xf32>
    %cst_11 = arith.constant dense<0x7F800000> : vector<8xf32>
    %27 = vector.multi_reduction <minimumf>, %26, %cst_11 [1] : vector<8x128xf32> to vector<8xf32>
    %28 = vector.shape_cast %27 : vector<8xf32> to vector<8x1xf32>
    %29 = vector.broadcast %28 : vector<8x1xf32> to vector<8x128xf32>
    %30 = arith.cmpf oeq, %5, %29 : vector<8x128xf32>
    %cst_12 = arith.constant 0xFF800000 : f32
    %31 = vector.broadcast %cst_12 : f32 to vector<8x128xf32>
    %32 = arith.select %30, %31, %20 : vector<8x128xi1>, vector<8x128xf32>
    %cst_13 = arith.constant dense<0xFF800000> : vector<8xf32>
    %33 = vector.multi_reduction <maximumf>, %32, %cst_13 [1] : vector<8x128xf32> to vector<8xf32>
    %34 = vector.shape_cast %33 : vector<8xf32> to vector<8x1xf32>
    %35 = vector.broadcast %34 : vector<8x1xf32> to vector<8x128xf32>
    %36 = arith.cmpf oeq, %32, %35 : vector<8x128xf32>
    %cst_14 = arith.constant 1.280000e+02 : f32
    %37 = vector.broadcast %cst_14 : f32 to vector<8x128xf32>
    %38 = arith.select %36, %5, %37 : vector<8x128xi1>, vector<8x128xf32>
    %cst_15 = arith.constant dense<0x7F800000> : vector<8xf32>
    %39 = vector.multi_reduction <minimumf>, %38, %cst_15 [1] : vector<8x128xf32> to vector<8xf32>
    %40 = vector.shape_cast %39 : vector<8xf32> to vector<8x1xf32>
    %41 = vector.broadcast %40 : vector<8x1xf32> to vector<8x128xf32>
    %42 = arith.cmpf oeq, %5, %41 : vector<8x128xf32>
    %cst_16 = arith.constant 0xFF800000 : f32
    %43 = vector.broadcast %cst_16 : f32 to vector<8x128xf32>
    %44 = arith.select %42, %43, %32 : vector<8x128xi1>, vector<8x128xf32>
    %cst_17 = arith.constant dense<0xFF800000> : vector<8xf32>
    %45 = vector.multi_reduction <maximumf>, %44, %cst_17 [1] : vector<8x128xf32> to vector<8xf32>
    %46 = vector.shape_cast %45 : vector<8xf32> to vector<8x1xf32>
    %47 = vector.broadcast %46 : vector<8x1xf32> to vector<8x128xf32>
    %48 = arith.cmpf oeq, %44, %47 : vector<8x128xf32>
    %cst_18 = arith.constant 1.280000e+02 : f32
    %49 = vector.broadcast %cst_18 : f32 to vector<8x128xf32>
    %50 = arith.select %48, %5, %49 : vector<8x128xi1>, vector<8x128xf32>
    %cst_19 = arith.constant dense<0x7F800000> : vector<8xf32>
    %51 = vector.multi_reduction <minimumf>, %50, %cst_19 [1] : vector<8x128xf32> to vector<8xf32>
    %52 = vector.shape_cast %51 : vector<8xf32> to vector<8x1xf32>
    %53 = vector.broadcast %52 : vector<8x1xf32> to vector<8x128xf32>
    %54 = arith.cmpf oeq, %5, %53 : vector<8x128xf32>
    %cst_20 = arith.constant 0xFF800000 : f32
    %55 = vector.broadcast %cst_20 : f32 to vector<8x128xf32>
    %56 = arith.select %54, %55, %44 : vector<8x128xi1>, vector<8x128xf32>
    %cst_21 = arith.constant dense<0xFF800000> : vector<8xf32>
    %57 = vector.multi_reduction <maximumf>, %56, %cst_21 [1] : vector<8x128xf32> to vector<8xf32>
    %58 = vector.shape_cast %57 : vector<8xf32> to vector<8x1xf32>
    %59 = vector.broadcast %58 : vector<8x1xf32> to vector<8x128xf32>
    %60 = arith.cmpf oeq, %56, %59 : vector<8x128xf32>
    %cst_22 = arith.constant 1.280000e+02 : f32
    %61 = vector.broadcast %cst_22 : f32 to vector<8x128xf32>
    %62 = arith.select %60, %5, %61 : vector<8x128xi1>, vector<8x128xf32>
    %cst_23 = arith.constant dense<0x7F800000> : vector<8xf32>
    %63 = vector.multi_reduction <minimumf>, %62, %cst_23 [1] : vector<8x128xf32> to vector<8xf32>
    %64 = vector.shape_cast %63 : vector<8xf32> to vector<8x1xf32>
    %65 = vector.broadcast %64 : vector<8x1xf32> to vector<8x128xf32>
    %66 = arith.cmpf oeq, %5, %65 : vector<8x128xf32>
    %cst_24 = arith.constant 0xFF800000 : f32
    %67 = vector.broadcast %cst_24 : f32 to vector<8x128xf32>
    %68 = arith.select %66, %67, %56 : vector<8x128xi1>, vector<8x128xf32>
    %cst_25 = arith.constant dense<0xFF800000> : vector<8xf32>
    %69 = vector.multi_reduction <maximumf>, %68, %cst_25 [1] : vector<8x128xf32> to vector<8xf32>
    %70 = vector.shape_cast %69 : vector<8xf32> to vector<8x1xf32>
    %71 = vector.broadcast %70 : vector<8x1xf32> to vector<8x128xf32>
    %72 = arith.cmpf oeq, %68, %71 : vector<8x128xf32>
    %cst_26 = arith.constant 1.280000e+02 : f32
    %73 = vector.broadcast %cst_26 : f32 to vector<8x128xf32>
    %74 = arith.select %72, %5, %73 : vector<8x128xi1>, vector<8x128xf32>
    %cst_27 = arith.constant dense<0x7F800000> : vector<8xf32>
    %75 = vector.multi_reduction <minimumf>, %74, %cst_27 [1] : vector<8x128xf32> to vector<8xf32>
    %76 = vector.shape_cast %75 : vector<8xf32> to vector<8x1xf32>
    %77 = vector.broadcast %76 : vector<8x1xf32> to vector<8x128xf32>
    %78 = arith.cmpf oeq, %5, %77 : vector<8x128xf32>
    %cst_28 = arith.constant 0xFF800000 : f32
    %79 = vector.broadcast %cst_28 : f32 to vector<8x128xf32>
    %80 = arith.select %78, %79, %68 : vector<8x128xi1>, vector<8x128xf32>
    %cst_29 = arith.constant dense<0xFF800000> : vector<8xf32>
    %81 = vector.multi_reduction <maximumf>, %80, %cst_29 [1] : vector<8x128xf32> to vector<8xf32>
    %82 = vector.shape_cast %81 : vector<8xf32> to vector<8x1xf32>
    %83 = vector.broadcast %82 : vector<8x1xf32> to vector<8x128xf32>
    %84 = arith.cmpf oeq, %80, %83 : vector<8x128xf32>
    %cst_30 = arith.constant 1.280000e+02 : f32
    %85 = vector.broadcast %cst_30 : f32 to vector<8x128xf32>
    %86 = arith.select %84, %5, %85 : vector<8x128xi1>, vector<8x128xf32>
    %cst_31 = arith.constant dense<0x7F800000> : vector<8xf32>
    %87 = vector.multi_reduction <minimumf>, %86, %cst_31 [1] : vector<8x128xf32> to vector<8xf32>
    %88 = vector.shape_cast %87 : vector<8xf32> to vector<8x1xf32>
    %cst_32 = arith.constant 0.000000e+00 : f32
    %89 = vector.broadcast %cst_32 : f32 to vector<8x122xf32>
    %90 = tpu.concatenate %22, %34, %46, %58, %70, %82, %89 in 1 : vector<8x1xf32>, vector<8x1xf32>, vector<8x1xf32>, vector<8x1xf32>, vector<8x1xf32>, vector<8x1xf32>, vector<8x122xf32> -> vector<8x128xf32>
    %91 = tpu.concatenate %28, %40, %52, %64, %76, %88, %89 in 1 : vector<8x1xf32>, vector<8x1xf32>, vector<8x1xf32>, vector<8x1xf32>, vector<8x1xf32>, vector<8x1xf32>, vector<8x122xf32> -> vector<8x128xf32>
    %92 = vector.broadcast %16 : vector<8x1xf32> to vector<8x128xf32>
    %93 = arith.divf %90, %92 : vector<8x128xf32>
    %c0_33 = arith.constant 0 : index
    %c0_34 = arith.constant 0 : index
    %94 = vector.load %arg3[%c0_33, %c0_34] : memref<8x128xf32, #tpu.memory_space<vmem>>, vector<8x128xf32>
    tpu.vector_store %arg3[%c0_33, %c0_34], %93 {strides = array<i32>} : memref<8x128xf32, #tpu.memory_space<vmem>>, vector<8x128xf32>,
    %95 = arith.fptosi %91 : vector<8x128xf32> to vector<8x128xi32>
    %c0_35 = arith.constant 0 : index
    %c0_36 = arith.constant 0 : index
    %96 = vector.load %arg4[%c0_35, %c0_36] : memref<8x128xi32, #tpu.memory_space<vmem>>, vector<8x128xi32>
    tpu.vector_store %arg4[%c0_35, %c0_36], %95 {strides = array<i32>} : memref<8x128xi32, #tpu.memory_space<vmem>>, vector<8x128xi32>,
    return
  }
  func.func @transform_0(%arg0: i32) -> (i32, i32) {
    %c0_i32 = arith.constant 0 : i32
    %c0_i32_0 = arith.constant 0 : i32
    return %arg0, %c0_i32 : i32, i32
  }
  func.func @transform_1(%arg0: i32) -> (i32, i32) {
    %c0_i32 = arith.constant 0 : i32
    %c0_i32_0 = arith.constant 0 : i32
    %c0_i32_1 = arith.constant 0 : i32
    return %c0_i32, %c0_i32_0 : i32, i32
  }
  func.func @transform_2(%arg0: i32) -> (i32, i32) {
    %c0_i32 = arith.constant 0 : i32
    %c0_i32_0 = arith.constant 0 : i32
    return %arg0, %c0_i32 : i32, i32
  }
  func.func @transform_3(%arg0: i32) -> (i32, i32) {
    %c0_i32 = arith.constant 0 : i32
    %c0_i32_0 = arith.constant 0 : i32
    return %arg0, %c0_i32 : i32, i32
  }
}

</mosaic_0001>

<llo_original>
// kernel: tpu_custom_call.1
$region0: #{tpu_custom_call.1}
  #allocation0 [shape = 'u32[]', space=smem, size = 0x4, offset = 0x4, fixed_abs, tag = 'smem constant byte address 0x4 - core index']
  #allocation1 [shape = 'u32[72,128]{1,0:T(1,128)}', space=vmem, size = 0x9000, scoped, tag = 'internal scratch']
  %s0 = inlined_call_operand.hbm [shape: f32[16,128], index: 0, kind: input, shape index: {}]
  %s1 = inlined_call_operand.hbm [shape: bf16[128,128], index: 1, kind: input, shape index: {}]
  %s2 = inlined_call_operand.hbm [shape: f32[16,128], index: 2, kind: output, shape index: {0}]
  %s3 = inlined_call_operand.hbm [shape: s32[16,128], index: 3, kind: output, shape index: {1}]
  %4 = xla_tuple %s2, %s3
  %s5 = sld [smem:[#allocation0]]
  $region57: #{tpu_custom_call.1} parent=0
    _
  %s7 = ssub.s32 1, %s5
  %s8 = scalar_select 0, %s7, %s5
  $region1: #{tpu_custom_call.1} parent=0
    #allocation2 [shape = 'u8[8192]{0}', space=vmem, size = 0x2000, scoped, tag = 'input window, operand 0']
    #allocation3 [shape = 's32[2]{0}', space=sflag, size = 0x8, scoped, tag = 'scoped memory for tpu_custom_call.1']
    #allocation4 [shape = 's32[2]{0}', space=sflag, size = 0x8, scoped, tag = 'scoped memory for tpu_custom_call.1']
    #allocation5 [shape = 'u8[32768]{0}', space=vmem, size = 0x8000, scoped, tag = 'input window, operand 1, single buffered']
    #allocation6 [shape = 's32[1]{0}', space=sflag, size = 0x4, scoped, tag = 'scoped memory for tpu_custom_call.1']
    #allocation7 [shape = 'u8[8192]{0}', space=vmem, size = 0x2000, scoped, tag = 'output window, operand 0']
    #allocation8 [shape = 'u8[8192]{0}', space=vmem, size = 0x2000, scoped, tag = 'output window, operand 1']
    #allocation9 [shape = 's32[2]{0}', space=sflag, size = 0x8, scoped, tag = 'scoped memory for tpu_custom_call.1']
    %9 = vsyncpa [#allocation3], 0
    %s10 = scalar_lea.sflag [#allocation3], 1
    %11 = vsyncpa %s10, 0
    %12 = vsyncpa [#allocation6], 0
    %13 = vsyncpa [#allocation4], 0
    %s14 = scalar_lea.sflag [#allocation4], 1
    %15 = vsyncpa %s14, 0
    %16 = vsyncpa [#allocation9], 0
    %s17 = scalar_lea.sflag [#allocation9], 1
    %18 = vsyncpa %s17, 0
    loop: start=0, step=1, limit=4
    $region2: #{tpu_custom_call.1} parent=1 // loop_pre_header
      _
    $region3: #{tpu_custom_call.1} parent=1 // loop_header
      %s20 = sphi 0, %s24
      %p21 = scmp.ge.s32.totalorder %s20, 4
      %s30 = sphi 0, %s32
      %s33 = sphi 0, %s30
      %s34 = sphi 0, %s33
      %s50 = sphi 0, %s34
      %s54 = sphi 0, %s54
      %s56 = sphi 0, %s54
      %s57 = sphi 0, %s56
      %s71 = sphi 0, %s57
      %s77 = sphi 0, %s79
      %s80 = sphi 0, %s77
      %s81 = sphi 0, %s80
      %s97 = sphi 0, %s81
      %s103 = sphi 0, %s105
      %s106 = sphi 0, %s103
      %s107 = sphi 0, %s106
      %s123 = sphi 0, %s107
    $region4: #{tpu_custom_call.1} parent=1 // loop_header_branch
      %23 = sbr.rel (%p21) target = $region8
    $region5: #{tpu_custom_call.1} parent=1 // loop_body
      %s25 = ssub.s32 %s20, 1
      %s26 = ssub.s32 %s20, 2
      %s27 = sadd.s32 %s20, 1
      %s28 = ssub.s32 %s20, %s27
      %p29 = scmp.eq.s32.totalorder %s28, 0
      %s31 = sadd.s32 %s30, 1
      %s32 = scalar_select %p29, %s30, %s31
      %p35 = pneg %p29
      %p36 = scmp.eq.s32.totalorder %s20, 1
      %p37 = por %p35, %p36
      %p38 = scmp.ne.s32.totalorder %s30, %s33
      %p39 = scmp.eq.s32.totalorder %s20, 0
      %p40 = por %p38, %p39
      %p41 = scmp.ne.s32.totalorder %s30, %s33
      %p42 = scmp.eq.s32.totalorder %s25, 1
      %p43 = por %p41, %p42
      %p44 = scmp.ne.s32.totalorder %s33, %s34
      %p45 = scmp.eq.s32.totalorder %s25, 0
      %p46 = por %p44, %p45
      %p47 = scmp.ne.s32.totalorder %s33, %s34
      %p48 = scmp.eq.s32.totalorder %s26, 1
      %p49 = por %p47, %p48
      %p51 = scmp.ne.s32.totalorder %s34, %s50
      %p52 = scmp.eq.s32.totalorder %s26, 0
      %p53 = por %p51, %p52
      %s55 = sadd.s32 %s54, 1
      %p58 = scmp.eq.s32.totalorder %s20, 1
      %p59 = scmp.ne.s32.totalorder %s54, %s56
      %p60 = scmp.eq.s32.totalorder %s20, 0
      %p61 = por %p59, %p60
      %p62 = scmp.ne.s32.totalorder %s54, %s56
      %p63 = scmp.eq.s32.totalorder %s25, 1
      %p64 = por %p62, %p63
      %p65 = scmp.ne.s32.totalorder %s56, %s57
      %p66 = scmp.eq.s32.totalorder %s25, 0
      %p67 = por %p65, %p66
      %p68 = scmp.ne.s32.totalorder %s56, %s57
      %p69 = scmp.eq.s32.totalorder %s26, 1
      %p70 = por %p68, %p69
      %p72 = scmp.ne.s32.totalorder %s57, %s71
      %p73 = scmp.eq.s32.totalorder %s26, 0
      %p74 = por %p72, %p73
      %s75 = ssub.s32 %s20, %s27
      %p76 = scmp.eq.s32.totalorder %s75, 0
      %s78 = sadd.s32 %s77, 1
      %s79 = scalar_select %p76, %s77, %s78
      %p82 = pneg %p76
      %p83 = scmp.eq.s32.totalorder %s20, 1
      %p84 = por %p82, %p83
      %p85 = scmp.ne.s32.totalorder %s77, %s80
      %p86 = scmp.eq.s32.totalorder %s20, 0
      %p87 = por %p85, %p86
      %p88 = scmp.ne.s32.totalorder %s77, %s80
      %p89 = scmp.eq.s32.totalorder %s25, 1
      %p90 = por %p88, %p89
      %p91 = scmp.ne.s32.totalorder %s80, %s81
      %p92 = scmp.eq.s32.totalorder %s25, 0
      %p93 = por %p91, %p92
      %p94 = scmp.ne.s32.totalorder %s80, %s81
      %p95 = scmp.eq.s32.totalorder %s26, 1
      %p96 = por %p94, %p95
      %p98 = scmp.ne.s32.totalorder %s81, %s97
      %p99 = scmp.eq.s32.totalorder %s26, 0
      %p100 = por %p98, %p99
      %s101 = ssub.s32 %s20, %s27
      %p102 = scmp.eq.s32.totalorder %s101, 0
      %s104 = sadd.s32 %s103, 1
      %s105 = scalar_select %p102, %s103, %s104
      %p108 = pneg %p102
      %p109 = scmp.eq.s32.totalorder %s20, 1
      %p110 = por %p108, %p109
      %p111 = scmp.ne.s32.totalorder %s103, %s106
      %p112 = scmp.eq.s32.totalorder %s20, 0
      %p113 = por %p111, %p112
      %p114 = scmp.ne.s32.totalorder %s103, %s106
      %p115 = scmp.eq.s32.totalorder %s25, 1
      %p116 = por %p114, %p115
      %p117 = scmp.ne.s32.totalorder %s106, %s107
      %p118 = scmp.eq.s32.totalorder %s25, 0
      %p119 = por %p117, %p118
      %p120 = scmp.ne.s32.totalorder %s106, %s107
      %p121 = scmp.eq.s32.totalorder %s26, 1
      %p122 = por %p120, %p121
      %p124 = scmp.ne.s32.totalorder %s107, %s123
      %p125 = scmp.eq.s32.totalorder %s26, 0
      %p126 = por %p124, %p125
      %p127 = scmp.le.s32.totalorder 1, %s20
      %p128 = scmp.lt.s32.totalorder %s20, 3
      %p129 = pnand %p127, %p128
      %p130 = pneg %p129
      // Predicated region
      $region9: #{tpu_custom_call.1} parent=5 // pred_check
        _
      $region10: #{tpu_custom_call.1} parent=5 // pred_check_branch
        %132 = sbr.rel (%p129) target = $region12
      $region11: #{tpu_custom_call.1} parent=5 // pred_region
        %s133 = ssub.s32 %s20, 1
        // Predicated region
        $region13: #{tpu_custom_call.1} parent=11 // pred_check
          %p134 = pneg %p67
        $region14: #{tpu_custom_call.1} parent=11 // pred_check_branch
          %136 = sbr.rel (%p134) target = $region16
        $region15: #{tpu_custom_call.1} parent=11 // pred_region
          %138 = vsyncadd [#allocation6], 0
          %s139 = sshll.u32 %s1, 4
          %s140 = int_to_ptr.hbm [resolvable:$true] %s139
          %s141 = sshll.u32 [#allocation5], 4
          %s142 = int_to_ptr.vmem [resolvable:$true] %s141
          %147 = dma.hbm_to_vmem [thread:$0]  %s140, 1024, %s142, [#allocation6], 64, 64, 4
        $region16: #{tpu_custom_call.1} parent=11 // pred_fallthru
          _
      $region12: #{tpu_custom_call.1} parent=5 // pred_fallthru
        _
      %p148 = scmp.lt.s32.totalorder %s20, 2
      // Predicated region
      $region17: #{tpu_custom_call.1} parent=5 // pred_check
        %p149 = pneg %p148
      $region18: #{tpu_custom_call.1} parent=5 // pred_check_branch
        %151 = sbr.rel (%p149) target = $region20
      $region19: #{tpu_custom_call.1} parent=5 // pred_region
        // Predicated region
        $region21: #{tpu_custom_call.1} parent=19 // pred_check
          %p152 = pneg %p40
        $region22: #{tpu_custom_call.1} parent=19 // pred_check_branch
          %154 = sbr.rel (%p152) target = $region24
        $region23: #{tpu_custom_call.1} parent=19 // pred_region
          %s155 = sand.u32 %s30, 1
          %s156 = scalar_lea.sflag [#allocation3], %s155
          %s157 = sand.u32 %s30, 1
          %s158 = smul.addr %s157, 8
          %s159 = scalar_lea.vmem [#allocation2], %s158
          %161 = vsyncadd %s156, 0
          %s162 = smul.addr %s20, 8
          %s163 = scalar_lea.hbm %s0, %s162
          %s165 = sshll.u32 %s163, 4
          %s166 = int_to_ptr.hbm [resolvable:$true] %s165
          %s167 = sshll.u32 %s159, 4
          %s168 = int_to_ptr.vmem [resolvable:$true] %s167
          %170 = dma.hbm_to_vmem [thread:$0]  %s166, 128, %s168, %s156
        $region24: #{tpu_custom_call.1} parent=19 // pred_fallthru
          _
      $region20: #{tpu_custom_call.1} parent=5 // pred_fallthru
        _
      %p171 = scmp.le.s32.totalorder 1, %s20
      %p172 = scmp.lt.s32.totalorder %s20, 3
      %p173 = pnand %p171, %p172
      %p174 = pneg %p173
      // Predicated region
      $region25: #{tpu_custom_call.1} parent=5 // pred_check
        _
      $region26: #{tpu_custom_call.1} parent=5 // pred_check_branch
        %176 = sbr.rel (%p173) target = $region28
      $region27: #{tpu_custom_call.1} parent=5 // pred_region
        %s177 = ssub.s32 %s20, 1
        %s178 = sand.u32 %s33, 1
        %s179 = scalar_lea.sflag [#allocation3], %s178
        %s180 = sand.u32 %s33, 1
        %s181 = smul.addr %s180, 8
        %s182 = scalar_lea.vmem [#allocation2], %s181
        // Predicated region
        $region29: #{tpu_custom_call.1} parent=27 // pred_check
          %p183 = pneg %p46
        $region30: #{tpu_custom_call.1} parent=27 // pred_check_branch
          %185 = sbr.rel (%p183) target = $region32
        $region31: #{tpu_custom_call.1} parent=27 // pred_region
          %187 = dma.done %s179, 128
        $region32: #{tpu_custom_call.1} parent=27 // pred_fallthru
          _
        // Predicated region
        $region33: #{tpu_custom_call.1} parent=27 // pred_check
          %p188 = pneg %p67
        $region34: #{tpu_custom_call.1} parent=27 // pred_check_branch
          %190 = sbr.rel (%p188) target = $region36
        $region35: #{tpu_custom_call.1} parent=27 // pred_region
          %192 = dma.done [#allocation6], 1024
        $region36: #{tpu_custom_call.1} parent=27 // pred_fallthru
          _
        %s193 = sand.u32 %s33, 1
        %s194 = scalar_lea.sflag [#allocation3], %s193
        %s195 = sand.u32 %s33, 1
        %s196 = smul.addr %s195, 8
        %s197 = scalar_lea.vmem [#allocation2], %s196
        %p198 = pneg %p46
        %p199 = pneg %p43
        %p200 = pneg %p67
        %p201 = pneg %p64
        %p202 = pneg %p93
        %p203 = pneg %p90
        %s204 = sand.u32 %s80, 1
        %s205 = scalar_lea.sflag [#allocation4], %s204
        %s206 = sand.u32 %s80, 1
        %s207 = smul.addr %s206, 8
        %s208 = scalar_lea.vmem [#allocation7], %s207
        %p209 = pneg %p119
        %p210 = pneg %p116
        %s211 = sand.u32 %s106, 1
        %s212 = scalar_lea.sflag [#allocation9], %s211
        %s213 = sand.u32 %s106, 1
        %s214 = smul.addr %s213, 8
        %s215 = scalar_lea.vmem [#allocation8], %s214
        %v216 = vld [vmem:[%s182] sm:$0xff]
        %v217 = vpack.c.bf16 %v216, %v216
        %v218 = vld [vmem:[#allocation5] sm:$0xf]
        %v219 = vld [vmem:[#allocation5 + $0x4] sm:$0xf]
        %v220 = vld [vmem:[#allocation5 + $0x8] sm:$0xf]
        %v221 = vld [vmem:[#allocation5 + $0xc] sm:$0xf]
        %v222 = vld [vmem:[#allocation5 + $0x10] sm:$0xf]
        %v223 = vld [vmem:[#allocation5 + $0x14] sm:$0xf]
        %v224 = vld [vmem:[#allocation5 + $0x18] sm:$0xf]
        %v225 = vld [vmem:[#allocation5 + $0x1c] sm:$0xf]
        %v226 = vld [vmem:[#allocation5 + $0x20] sm:$0xf]
        %v227 = vld [vmem:[#allocation5 + $0x24] sm:$0xf]
        %v228 = vld [vmem:[#allocation5 + $0x28] sm:$0xf]
        %v229 = vld [vmem:[#allocation5 + $0x2c] sm:$0xf]
        %v230 = vld [vmem:[#allocation5 + $0x30] sm:$0xf]
        %v231 = vld [vmem:[#allocation5 + $0x34] sm:$0xf]
        %v232 = vld [vmem:[#allocation5 + $0x38] sm:$0xf]
        %v233 = vld [vmem:[#allocation5 + $0x3c] sm:$0xf]
        %v250 = vunpack.c.l.b16 %v218
        %v251 = vunpack.c.l.b16 %v219
        %v252 = vunpack.c.l.b16 %v220
        %v253 = vunpack.c.l.b16 %v221
        %v254 = vunpack.c.l.b16 %v222
        %v255 = vunpack.c.l.b16 %v223
        %v256 = vunpack.c.l.b16 %v224
        %v257 = vunpack.c.l.b16 %v225
        %v258 = vunpack.c.l.b16 %v226
        %v259 = vunpack.c.l.b16 %v227
        %v260 = vunpack.c.l.b16 %v228
        %v261 = vunpack.c.l.b16 %v229
        %v262 = vunpack.c.l.b16 %v230
        %v263 = vunpack.c.l.b16 %v231
        %v264 = vunpack.c.l.b16 %v232
        %v265 = vunpack.c.l.b16 %v233
        %v266 = vpack.c.b16 %v251, %v250
        %v267 = vpack.c.b16 %v253, %v252
        %v268 = vpack.c.b16 %v255, %v254
        %v269 = vpack.c.b16 %v257, %v256
        %v270 = vpack.c.b16 %v259, %v258
        %v271 = vpack.c.b16 %v261, %v260
        %v272 = vpack.c.b16 %v263, %v262
        %v273 = vpack.c.b16 %v265, %v264
        %282 = vmatpush.bf16.msra.mxu0 %v273
        %283 = vmatpush.bf16.msra.mxu0 %v272
        %284 = vmatpush.bf16.msra.mxu0 %v271
        %285 = vmatpush.bf16.msra.mxu0 %v270
        %286 = vmatpush.bf16.msra.mxu0 %v269
        %287 = vmatpush.bf16.msra.mxu0 %v268
        %288 = vmatpush.bf16.msra.mxu0 %v267
        %289 = vmatpush.bf16.msra.mxu0 %v266
        %290 = vmatmul.bf16.gmra.mxu0 %v217
        %v291 = vpop.f32.mrf.mxu0
        %v292 = vadd.f32 0.0, %v291
        %v293 = vpop.f32.mrf.mxu0
        %294 = vdwg.mxu0
        %v295 = vlaneseq
        %v296 = vand.u32 %v295, 127
        %v297 = vcvt.s32.f32 %v296
        %vm298 = vcmp.lt.f32.partialorder %v297, 64.0
        %v299 = vsel %vm298, %v292, -inf
        %300 = vmax.xlane.f32.xlu0 %v299
        %v301 = vpop.xlane.xlu0 %300
        %v302 = vsub.f32 %v299, %v301
        %v303 = vmul.f32 %v302, 1.442695
        %v304 = vpow.pop %v303
        %305 = vadd.xlane.f32.xlu0 %v304
        %v306 = vpop.xlane.xlu0 %305
        %v307 = vsel %vm298, %v304, -inf
        %308 = vmax.xlane.f32.xlu0 %v307
        %v309 = vpop.xlane.xlu0 %308
        %vm310 = vcmp.eq.f32.partialorder %v307, %v309
        %v311 = vsel %vm310, %v297, 128.0
        %312 = vmin.xlane.f32.xlu0 %v311
        %v313 = vpop.xlane.xlu0 %312
        %vm314 = vcmp.eq.f32.partialorder %v297, %v313
        %v315 = vsel %vm314, -inf, %v307
        %316 = vmax.xlane.f32.xlu0 %v315
        %v317 = vpop.xlane.xlu0 %316
        %vm318 = vcmp.eq.f32.partialorder %v315, %v317
        %v319 = vsel %vm318, %v297, 128.0
        %320 = vmin.xlane.f32.xlu0 %v319
        %v321 = vpop.xlane.xlu0 %320
        %vm322 = vcmp.eq.f32.partialorder %v297, %v321
        %v323 = vsel %vm322, -inf, %v315
        %324 = vmax.xlane.f32.xlu0 %v323
        %v325 = vpop.xlane.xlu0 %324
        %vm326 = vcmp.eq.f32.partialorder %v323, %v325
        %v327 = vsel %vm326, %v297, 128.0
        %328 = vmin.xlane.f32.xlu0 %v327
        %v329 = vpop.xlane.xlu0 %328
        %vm330 = vcmp.eq.f32.partialorder %v297, %v329
        %v331 = vsel %vm330, -inf, %v323
        %332 = vmax.xlane.f32.xlu0 %v331
        %v333 = vpop.xlane.xlu0 %332
        %vm334 = vcmp.eq.f32.partialorder %v331, %v333
        %v335 = vsel %vm334, %v297, 128.0
        %336 = vmin.xlane.f32.xlu0 %v335
        %v337 = vpop.xlane.xlu0 %336
        %vm338 = vcmp.eq.f32.partialorder %v297, %v337
        %v339 = vsel %vm338, -inf, %v331
        %340 = vmax.xlane.f32.xlu0 %v339
        %v341 = vpop.xlane.xlu0 %340
        %vm342 = vcmp.eq.f32.partialorder %v339, %v341
        %v343 = vsel %vm342, %v297, 128.0
        %344 = vmin.xlane.f32.xlu0 %v343
        %v345 = vpop.xlane.xlu0 %344
        %vm346 = vcmp.eq.f32.partialorder %v297, %v345
        %v347 = vsel %vm346, -inf, %v339
        %348 = vmax.xlane.f32.xlu0 %v347
        %v349 = vpop.xlane.xlu0 %348
        %vm350 = vcmp.eq.f32.partialorder %v347, %v349
        %v351 = vsel %vm350, %v297, 128.0
        %352 = vmin.xlane.f32.xlu0 %v351
        %v353 = vpop.xlane.xlu0 %352
        %vm354 = vcmask 7168
        %v355 = vsel %vm354, %v309, %v317
        %vm356 = vcmask 15360
        %v357 = vsel %vm356, %v355, %v325
        %vm358 = vcmask 23552
        %v359 = vsel %vm358, %v357, %v333
        %vm360 = vcmask 31744
        %v361 = vsel %vm360, %v359, %v341
        %vm362 = vcmask 39936
        %v363 = vsel %vm362, %v361, %v349
        %vm364 = vcmask 48128
        %v365 = vsel %vm364, %v363, 0.0
        %v366 = vsel %vm354, %v313, %v321
        %v367 = vsel %vm356, %v366, %v329
        %v368 = vsel %vm358, %v367, %v337
        %v369 = vsel %vm360, %v368, %v345
        %v370 = vsel %vm362, %v369, %v353
        %v371 = vsel %vm364, %v370, 0.0
        %v372 = vrcp.pop %v306
        %v373 = vmul.f32 %v306, %v372
        %v374 = vsub.f32 1.0, %v373
        %v375 = vmul.f32 %v372, %v374
        %v376 = vadd.f32 %v372, %v375
        %vm377 = vweird.f32 %v306
        %vm378 = vweird.f32 %v372
        %vm379 = vmor %vm377, %vm378
        %v380 = vsel %vm379, %v372, %v376
        %v381 = vand.u32 2147483647, %v306
        %vm382 = vcmp.eq.f32.partialorder %v381, 8.507059e+37
        %v383 = vand.u32 %v306, 2147483648
        %v384 = vor.u32 1.1754944e-38, %v383
        %v385 = vsel %vm382, %v384, %v380
        %v386 = vmul.f32 %v365, %v385
        %387 = vst [vmem:[%s208] sm:$0xff] %v386
        %v388 = vcvt.f32.s32.to.zero.pseudo %v371
        %389 = vst [vmem:[%s215] sm:$0xff] %v388
        %s390 = sand.u32 %s80, 1
        %s391 = scalar_lea.sflag [#allocation4], %s390
        %s392 = sand.u32 %s80, 1
        %s393 = smul.addr %s392, 8
        %s394 = scalar_lea.vmem [#allocation7], %s393
        %s395 = sand.u32 %s106, 1
        %s396 = scalar_lea.sflag [#allocation9], %s395
        %s397 = sand.u32 %s106, 1
        %s398 = smul.addr %s397, 8
        %s399 = scalar_lea.vmem [#allocation8], %s398
        // Predicated region
        $region37: #{tpu_custom_call.1} parent=27 // pred_check
          %p400 = pneg %p90
        $region38: #{tpu_custom_call.1} parent=27 // pred_check_branch
          %402 = sbr.rel (%p400) target = $region40
        $region39: #{tpu_custom_call.1} parent=27 // pred_region
          %404 = vsyncadd %s391, 0
          %s405 = smul.addr %s25, 8
          %s406 = scalar_lea.hbm %s2, %s405
          %s408 = sshll.u32 %s394, 4
          %s409 = int_to_ptr.vmem [resolvable:$true] %s408
          %s410 = sshll.u32 %s406, 4
          %s411 = int_to_ptr.hbm [resolvable:$true] %s410
          %413 = dma.vmem_to_hbm [thread:$0]  %s409, 128, %s411, %s391
        $region40: #{tpu_custom_call.1} parent=27 // pred_fallthru
          _
        // Predicated region
        $region41: #{tpu_custom_call.1} parent=27 // pred_check
          %p414 = pneg %p116
        $region42: #{tpu_custom_call.1} parent=27 // pred_check_branch
          %416 = sbr.rel (%p414) target = $region44
        $region43: #{tpu_custom_call.1} parent=27 // pred_region
          %418 = vsyncadd %s396, 0
          %s419 = smul.addr %s25, 8
          %s420 = scalar_lea.hbm %s3, %s419
          %s422 = sshll.u32 %s399, 4
          %s423 = int_to_ptr.vmem [resolvable:$true] %s422
          %s424 = sshll.u32 %s420, 4
          %s425 = int_to_ptr.hbm [resolvable:$true] %s424
          %427 = dma.vmem_to_hbm [thread:$0]  %s423, 128, %s425, %s396
        $region44: #{tpu_custom_call.1} parent=27 // pred_fallthru
          _
      $region28: #{tpu_custom_call.1} parent=5 // pred_fallthru
        _
      %p428 = scmp.le.s32.totalorder 2, %s20
      // Predicated region
      $region45: #{tpu_custom_call.1} parent=5 // pred_check
        %p429 = pneg %p428
      $region46: #{tpu_custom_call.1} parent=5 // pred_check_branch
        %431 = sbr.rel (%p429) target = $region48
      $region47: #{tpu_custom_call.1} parent=5 // pred_region
        %s432 = ssub.s32 %s20, 2
        // Predicated region
        $region49: #{tpu_custom_call.1} parent=47 // pred_check
          %p433 = pneg %p96
        $region50: #{tpu_custom_call.1} parent=47 // pred_check_branch
          %435 = sbr.rel (%p433) target = $region52
        $region51: #{tpu_custom_call.1} parent=47 // pred_region
          %s436 = sand.u32 %s81, 1
          %s437 = scalar_lea.sflag [#allocation4], %s436
          %s438 = sand.u32 %s81, 1
          %s439 = smul.addr %s438, 8
          %s440 = scalar_lea.vmem [#allocation7], %s439
          %442 = dma.done %s437, 128
        $region52: #{tpu_custom_call.1} parent=47 // pred_fallthru
          _
        // Predicated region
        $region53: #{tpu_custom_call.1} parent=47 // pred_check
          %p443 = pneg %p122
        $region54: #{tpu_custom_call.1} parent=47 // pred_check_branch
          %445 = sbr.rel (%p443) target = $region56
        $region55: #{tpu_custom_call.1} parent=47 // pred_region
          %s446 = sand.u32 %s107, 1
          %s447 = scalar_lea.sflag [#allocation9], %s446
          %s448 = sand.u32 %s107, 1
          %s449 = smul.addr %s448, 8
          %s450 = scalar_lea.vmem [#allocation8], %s449
          %452 = dma.done %s447, 128
        $region56: #{tpu_custom_call.1} parent=47 // pred_fallthru
          _
      $region48: #{tpu_custom_call.1} parent=5 // pred_fallthru
        _
    $region6: #{tpu_custom_call.1} parent=1 // loop_footer
      %s24 = sadd.s32 1, %s20
    $region7: #{tpu_custom_call.1} parent=1 // loop_footer_branch
      %19 = sbr.rel target = $region3
    $region8: #{tpu_custom_call.1} parent=1 // loop_exit
      _
    %453 = vsyncpa [#allocation3], 1
    %s454 = scalar_lea.sflag [#allocation3], 1
    %455 = vsyncpa %s454, 1
    %456 = vsyncpa [#allocation6], 1
    %457 = vsyncpa [#allocation4], 1
    %s458 = scalar_lea.sflag [#allocation4], 1
    %459 = vsyncpa %s458, 1
    %460 = vsyncpa [#allocation9], 1
    %s461 = scalar_lea.sflag [#allocation9], 1
    %462 = vsyncpa %s461, 1

// kernel: tpu_custom_call.1
$region0: #{tpu_custom_call.1}
  #allocation0 [shape = 'u32[]', space=smem, size = 0x4, offset = 0x4, fixed_abs, tag = 'smem constant byte address 0x4 - core index']
  #allocation1 [shape = 'u32[72,128]{1,0:T(1,128)}', space=vmem, size = 0x9000, scoped, tag = 'internal scratch']
  %s0 = inlined_call_operand.hbm [shape: f32[16,128], index: 0, kind: input, shape index: {}]
  %s1 = inlined_call_operand.hbm [shape: bf16[128,128], index: 1, kind: input, shape index: {}]
  %s2 = inlined_call_operand.hbm [shape: f32[16,128], index: 2, kind: output, shape index: {0}]
  %s3 = inlined_call_operand.hbm [shape: s32[16,128], index: 3, kind: output, shape index: {1}]
  %4 = xla_tuple %s2, %s3
  %s5 = sld [smem:[#allocation0]]
  $region57: #{tpu_custom_call.1} parent=0
    _
  %s7 = ssub.s32 1, %s5
  %s8 = scalar_select 0, %s7, %s5
  $region1: #{tpu_custom_call.1} parent=0
    #allocation2 [shape = 'u8[8192]{0}', space=vmem, size = 0x2000, scoped, tag = 'input window, operand 0']
    #allocation3 [shape = 's32[2]{0}', space=sflag, size = 0x8, scoped, tag = 'scoped memory for tpu_custom_call.1']
    #allocation4 [shape = 's32[2]{0}', space=sflag, size = 0x8, scoped, tag = 'scoped memory for tpu_custom_call.1']
    #allocation5 [shape = 'u8[32768]{0}', space=vmem, size = 0x8000, scoped, tag = 'input window, operand 1, single buffered']
    #allocation6 [shape = 's32[1]{0}', space=sflag, size = 0x4, scoped, tag = 'scoped memory for tpu_custom_call.1']
    #allocation7 [shape = 'u8[8192]{0}', space=vmem, size = 0x2000, scoped, tag = 'output window, operand 0']
    #allocation8 [shape = 'u8[8192]{0}', space=vmem, size = 0x2000, scoped, tag = 'output window, operand 1']
    #allocation9 [shape = 's32[2]{0}', space=sflag, size = 0x8, scoped, tag = 'scoped memory for tpu_custom_call.1']
    %9 = vsyncpa [#allocation3], 0
    %s10 = scalar_lea.sflag [#allocation3], 1
    %11 = vsyncpa %s10, 0
    %12 = vsyncpa [#allocation6], 0
    %13 = vsyncpa [#allocation4], 0
    %s14 = scalar_lea.sflag [#allocation4], 1
    %15 = vsyncpa %s14, 0
    %16 = vsyncpa [#allocation9], 0
    %s17 = scalar_lea.sflag [#allocation9], 1
    %18 = vsyncpa %s17, 0
    loop: start=0, step=1, limit=4
    $region2: #{tpu_custom_call.1} parent=1 // loop_pre_header
      _
    $region3: #{tpu_custom_call.1} parent=1 // loop_header
      %s20 = sphi 0, %s24
      %p21 = scmp.ge.s32.totalorder %s20, 4
      %s30 = sphi 0, %s32
      %s33 = sphi 0, %s30
      %s34 = sphi 0, %s33
      %s50 = sphi 0, %s34
      %s54 = sphi 0, %s54
      %s56 = sphi 0, %s54
      %s57 = sphi 0, %s56
      %s71 = sphi 0, %s57
      %s77 = sphi 0, %s79
      %s80 = sphi 0, %s77
      %s81 = sphi 0, %s80
      %s97 = sphi 0, %s81
      %s103 = sphi 0, %s105
      %s106 = sphi 0, %s103
      %s107 = sphi 0, %s106
      %s123 = sphi 0, %s107
    $region4: #{tpu_custom_call.1} parent=1 // loop_header_branch
      %23 = sbr.rel (%p21) target = $region8
    $region5: #{tpu_custom_call.1} parent=1 // loop_body
      %s25 = ssub.s32 %s20, 1
      %s26 = ssub.s32 %s20, 2
      %s27 = sadd.s32 %s20, 1
      %s28 = ssub.s32 %s20, %s27
      %p29 = scmp.eq.s32.totalorder %s28, 0
      %s31 = sadd.s32 %s30, 1
      %s32 = scalar_select %p29, %s30, %s31
      %p35 = pneg %p29
      %p36 = scmp.eq.s32.totalorder %s20, 1
      %p37 = por %p35, %p36
      %p38 = scmp.ne.s32.totalorder %s30, %s33
      %p39 = scmp.eq.s32.totalorder %s20, 0
      %p40 = por %p38, %p39
      %p41 = scmp.ne.s32.totalorder %s30, %s33
      %p42 = scmp.eq.s32.totalorder %s25, 1
      %p43 = por %p41, %p42
      %p44 = scmp.ne.s32.totalorder %s33, %s34
      %p45 = scmp.eq.s32.totalorder %s25, 0
      %p46 = por %p44, %p45
      %p47 = scmp.ne.s32.totalorder %s33, %s34
      %p48 = scmp.eq.s32.totalorder %s26, 1
      %p49 = por %p47, %p48
      %p51 = scmp.ne.s32.totalorder %s34, %s50
      %p52 = scmp.eq.s32.totalorder %s26, 0
      %p53 = por %p51, %p52
      %s55 = sadd.s32 %s54, 1
      %p58 = scmp.eq.s32.totalorder %s20, 1
      %p59 = scmp.ne.s32.totalorder %s54, %s56
      %p60 = scmp.eq.s32.totalorder %s20, 0
      %p61 = por %p59, %p60
      %p62 = scmp.ne.s32.totalorder %s54, %s56
      %p63 = scmp.eq.s32.totalorder %s25, 1
      %p64 = por %p62, %p63
      %p65 = scmp.ne.s32.totalorder %s56, %s57
      %p66 = scmp.eq.s32.totalorder %s25, 0
      %p67 = por %p65, %p66
      %p68 = scmp.ne.s32.totalorder %s56, %s57
      %p69 = scmp.eq.s32.totalorder %s26, 1
      %p70 = por %p68, %p69
      %p72 = scmp.ne.s32.totalorder %s57, %s71
      %p73 = scmp.eq.s32.totalorder %s26, 0
      %p74 = por %p72, %p73
      %s75 = ssub.s32 %s20, %s27
      %p76 = scmp.eq.s32.totalorder %s75, 0
      %s78 = sadd.s32 %s77, 1
      %s79 = scalar_select %p76, %s77, %s78
      %p82 = pneg %p76
      %p83 = scmp.eq.s32.totalorder %s20, 1
      %p84 = por %p82, %p83
      %p85 = scmp.ne.s32.totalorder %s77, %s80
      %p86 = scmp.eq.s32.totalorder %s20, 0
      %p87 = por %p85, %p86
      %p88 = scmp.ne.s32.totalorder %s77, %s80
      %p89 = scmp.eq.s32.totalorder %s25, 1
      %p90 = por %p88, %p89
      %p91 = scmp.ne.s32.totalorder %s80, %s81
      %p92 = scmp.eq.s32.totalorder %s25, 0
      %p93 = por %p91, %p92
      %p94 = scmp.ne.s32.totalorder %s80, %s81
      %p95 = scmp.eq.s32.totalorder %s26, 1
      %p96 = por %p94, %p95
      %p98 = scmp.ne.s32.totalorder %s81, %s97
      %p99 = scmp.eq.s32.totalorder %s26, 0
      %p100 = por %p98, %p99
      %s101 = ssub.s32 %s20, %s27
      %p102 = scmp.eq.s32.totalorder %s101, 0
      %s104 = sadd.s32 %s103, 1
      %s105 = scalar_select %p102, %s103, %s104
      %p108 = pneg %p102
      %p109 = scmp.eq.s32.totalorder %s20, 1
      %p110 = por %p108, %p109
      %p111 = scmp.ne.s32.totalorder %s103, %s106
      %p112 = scmp.eq.s32.totalorder %s20, 0
      %p113 = por %p111, %p112
      %p114 = scmp.ne.s32.totalorder %s103, %s106
      %p115 = scmp.eq.s32.totalorder %s25, 1
      %p116 = por %p114, %p115
      %p117 = scmp.ne.s32.totalorder %s106, %s107
      %p118 = scmp.eq.s32.totalorder %s25, 0
      %p119 = por %p117, %p118
      %p120 = scmp.ne.s32.totalorder %s106, %s107
      %p121 = scmp.eq.s32.totalorder %s26, 1
      %p122 = por %p120, %p121
      %p124 = scmp.ne.s32.totalorder %s107, %s123
      %p125 = scmp.eq.s32.totalorder %s26, 0
      %p126 = por %p124, %p125
      %p127 = scmp.le.s32.totalorder 1, %s20
      %p128 = scmp.lt.s32.totalorder %s20, 3
      %p129 = pnand %p127, %p128
      %p130 = pneg %p129
      // Predicated region
      $region9: #{tpu_custom_call.1} parent=5 // pred_check
        _
      $region10: #{tpu_custom_call.1} parent=5 // pred_check_branch
        %132 = sbr.rel (%p129) target = $region12
      $region11: #{tpu_custom_call.1} parent=5 // pred_region
        %s133 = ssub.s32 %s20, 1
        // Predicated region
        $region13: #{tpu_custom_call.1} parent=11 // pred_check
          %p134 = pneg %p67
        $region14: #{tpu_custom_call.1} parent=11 // pred_check_branch
          %136 = sbr.rel (%p134) target = $region16
        $region15: #{tpu_custom_call.1} parent=11 // pred_region
          %138 = vsyncadd [#allocation6], 0
          %s139 = sshll.u32 %s1, 4
          %s140 = int_to_ptr.hbm [resolvable:$true] %s139
          %s141 = sshll.u32 [#allocation5], 4
          %s142 = int_to_ptr.vmem [resolvable:$true] %s141
          %147 = dma.hbm_to_vmem [thread:$0]  %s140, 1024, %s142, [#allocation6], 64, 64, 4
        $region16: #{tpu_custom_call.1} parent=11 // pred_fallthru
          _
      $region12: #{tpu_custom_call.1} parent=5 // pred_fallthru
        _
      %p148 = scmp.lt.s32.totalorder %s20, 2
      // Predicated region
      $region17: #{tpu_custom_call.1} parent=5 // pred_check
        %p149 = pneg %p148
      $region18: #{tpu_custom_call.1} parent=5 // pred_check_branch
        %151 = sbr.rel (%p149) target = $region20
      $region19: #{tpu_custom_call.1} parent=5 // pred_region
        // Predicated region
        $region21: #{tpu_custom_call.1} parent=19 // pred_check
          %p152 = pneg %p40
        $region22: #{tpu_custom_call.1} parent=19 // pred_check_branch
          %154 = sbr.rel (%p152) target = $region24
        $region23: #{tpu_custom_call.1} parent=19 // pred_region
          %s155 = sand.u32 %s30, 1
          %s156 = scalar_lea.sflag [#allocation3], %s155
          %s157 = sand.u32 %s30, 1
          %s158 = smul.addr %s157, 8
          %s159 = scalar_lea.vmem [#allocation2], %s158
          %161 = vsyncadd %s156, 0
          %s162 = smul.addr %s20, 8
          %s163 = scalar_lea.hbm %s0, %s162
          %s165 = sshll.u32 %s163, 4
          %s166 = int_to_ptr.hbm [resolvable:$true] %s165
          %s167 = sshll.u32 %s159, 4
          %s168 = int_to_ptr.vmem [resolvable:$true] %s167
          %170 = dma.hbm_to_vmem [thread:$0]  %s166, 128, %s168, %s156
        $region24: #{tpu_custom_call.1} parent=19 // pred_fallthru
          _
      $region20: #{tpu_custom_call.1} parent=5 // pred_fallthru
        _
      %p171 = scmp.le.s32.totalorder 1, %s20
      %p172 = scmp.lt.s32.totalorder %s20, 3
      %p173 = pnand %p171, %p172
      %p174 = pneg %p173
      // Predicated region
      $region25: #{tpu_custom_call.1} parent=5 // pred_check
        _
      $region26: #{tpu_custom_call.1} parent=5 // pred_check_branch
        %176 = sbr.rel (%p173) target = $region28
      $region27: #{tpu_custom_call.1} parent=5 // pred_region
        %s177 = ssub.s32 %s20, 1
        %s178 = sand.u32 %s33, 1
        %s179 = scalar_lea.sflag [#allocation3], %s178
        %s180 = sand.u32 %s33, 1
        %s181 = smul.addr %s180, 8
        %s182 = scalar_lea.vmem [#allocation2], %s181
        // Predicated region
        $region29: #{tpu_custom_call.1} parent=27 // pred_check
          %p183 = pneg %p46
        $region30: #{tpu_custom_call.1} parent=27 // pred_check_branch
          %185 = sbr.rel (%p183) target = $region32
        $region31: #{tpu_custom_call.1} parent=27 // pred_region
          %187 = dma.done %s179, 128
        $region32: #{tpu_custom_call.1} parent=27 // pred_fallthru
          _
        // Predicated region
        $region33: #{tpu_custom_call.1} parent=27 // pred_check
          %p188 = pneg %p67
        $region34: #{tpu_custom_call.1} parent=27 // pred_check_branch
          %190 = sbr.rel (%p188) target = $region36
        $region35: #{tpu_custom_call.1} parent=27 // pred_region
          %192 = dma.done [#allocation6], 1024
        $region36: #{tpu_custom_call.1} parent=27 // pred_fallthru
          _
        %s193 = sand.u32 %s33, 1
        %s194 = scalar_lea.sflag [#allocation3], %s193
        %s195 = sand.u32 %s33, 1
        %s196 = smul.addr %s195, 8
        %s197 = scalar_lea.vmem [#allocation2], %s196
        %p198 = pneg %p46
        %p199 = pneg %p43
        %p200 = pneg %p67
        %p201 = pneg %p64
        %p202 = pneg %p93
        %p203 = pneg %p90
        %s204 = sand.u32 %s80, 1
        %s205 = scalar_lea.sflag [#allocation4], %s204
        %s206 = sand.u32 %s80, 1
        %s207 = smul.addr %s206, 8
        %s208 = scalar_lea.vmem [#allocation7], %s207
        %p209 = pneg %p119
        %p210 = pneg %p116
        %s211 = sand.u32 %s106, 1
        %s212 = scalar_lea.sflag [#allocation9], %s211
        %s213 = sand.u32 %s106, 1
        %s214 = smul.addr %s213, 8
        %s215 = scalar_lea.vmem [#allocation8], %s214
        %v216 = vld [vmem:[%s182] sm:$0xff]
        %v217 = vpack.c.bf16 %v216, %v216
        %v218 = vld [vmem:[#allocation5] sm:$0xf]
        %v219 = vld [vmem:[#allocation5 + $0x4] sm:$0xf]
        %v220 = vld [vmem:[#allocation5 + $0x8] sm:$0xf]
        %v221 = vld [vmem:[#allocation5 + $0xc] sm:$0xf]
        %v222 = vld [vmem:[#allocation5 + $0x10] sm:$0xf]
        %v223 = vld [vmem:[#allocation5 + $0x14] sm:$0xf]
        %v224 = vld [vmem:[#allocation5 + $0x18] sm:$0xf]
        %v225 = vld [vmem:[#allocation5 + $0x1c] sm:$0xf]
        %v226 = vld [vmem:[#allocation5 + $0x20] sm:$0xf]
        %v227 = vld [vmem:[#allocation5 + $0x24] sm:$0xf]
        %v228 = vld [vmem:[#allocation5 + $0x28] sm:$0xf]
        %v229 = vld [vmem:[#allocation5 + $0x2c] sm:$0xf]
        %v230 = vld [vmem:[#allocation5 + $0x30] sm:$0xf]
        %v231 = vld [vmem:[#allocation5 + $0x34] sm:$0xf]
        %v232 = vld [vmem:[#allocation5 + $0x38] sm:$0xf]
        %v233 = vld [vmem:[#allocation5 + $0x3c] sm:$0xf]
        %v250 = vunpack.c.l.b16 %v218
        %v251 = vunpack.c.l.b16 %v219
        %v252 = vunpack.c.l.b16 %v220
        %v253 = vunpack.c.l.b16 %v221
        %v254 = vunpack.c.l.b16 %v222
        %v255 = vunpack.c.l.b16 %v223
        %v256 = vunpack.c.l.b16 %v224
        %v257 = vunpack.c.l.b16 %v225
        %v258 = vunpack.c.l.b16 %v226
        %v259 = vunpack.c.l.b16 %v227
        %v260 = vunpack.c.l.b16 %v228
        %v261 = vunpack.c.l.b16 %v229
        %v262 = vunpack.c.l.b16 %v230
        %v263 = vunpack.c.l.b16 %v231
        %v264 = vunpack.c.l.b16 %v232
        %v265 = vunpack.c.l.b16 %v233
        %v266 = vpack.c.b16 %v251, %v250
        %v267 = vpack.c.b16 %v253, %v252
        %v268 = vpack.c.b16 %v255, %v254
        %v269 = vpack.c.b16 %v257, %v256
        %v270 = vpack.c.b16 %v259, %v258
        %v271 = vpack.c.b16 %v261, %v260
        %v272 = vpack.c.b16 %v263, %v262
        %v273 = vpack.c.b16 %v265, %v264
        %282 = vmatpush.bf16.msra.mxu0 %v273
        %283 = vmatpush.bf16.msra.mxu0 %v272
        %284 = vmatpush.bf16.msra.mxu0 %v271
        %285 = vmatpush.bf16.msra.mxu0 %v270
        %286 = vmatpush.bf16.msra.mxu0 %v269
        %287 = vmatpush.bf16.msra.mxu0 %v268
        %288 = vmatpush.bf16.msra.mxu0 %v267
        %289 = vmatpush.bf16.msra.mxu0 %v266
        %290 = vmatmul.bf16.gmra.mxu0 %v217
        %v291 = vpop.f32.mrf.mxu0
        %v292 = vadd.f32 0.0, %v291
        %v293 = vpop.f32.mrf.mxu0
        %294 = vdwg.mxu0
        %v295 = vlaneseq
        %v296 = vand.u32 %v295, 127
        %v297 = vcvt.s32.f32 %v296
        %vm298 = vcmp.lt.f32.partialorder %v297, 64.0
        %v299 = vsel %vm298, %v292, -inf
        %300 = vmax.xlane.f32.xlu0 %v299
        %v301 = vpop.xlane.xlu0 %300
        %v302 = vsub.f32 %v299, %v301
        %v303 = vmul.f32 %v302, 1.442695
        %v304 = vpow.pop %v303
        %305 = vadd.xlane.f32.xlu0 %v304
        %v306 = vpop.xlane.xlu0 %305
        %v307 = vsel %vm298, %v304, -inf
        %308 = vmax.xlane.f32.xlu0 %v307
        %v309 = vpop.xlane.xlu0 %308
        %vm310 = vcmp.eq.f32.partialorder %v307, %v309
        %v311 = vsel %vm310, %v297, 128.0
        %312 = vmin.xlane.f32.xlu0 %v311
        %v313 = vpop.xlane.xlu0 %312
        %vm314 = vcmp.eq.f32.partialorder %v297, %v313
        %v315 = vsel %vm314, -inf, %v307
        %316 = vmax.xlane.f32.xlu0 %v315
        %v317 = vpop.xlane.xlu0 %316
        %vm318 = vcmp.eq.f32.partialorder %v315, %v317
        %v319 = vsel %vm318, %v297, 128.0
        %320 = vmin.xlane.f32.xlu0 %v319
        %v321 = vpop.xlane.xlu0 %320
        %vm322 = vcmp.eq.f32.partialorder %v297, %v321
        %v323 = vsel %vm322, -inf, %v315
        %324 = vmax.xlane.f32.xlu0 %v323
        %v325 = vpop.xlane.xlu0 %324
        %vm326 = vcmp.eq.f32.partialorder %v323, %v325
        %v327 = vsel %vm326, %v297, 128.0
        %328 = vmin.xlane.f32.xlu0 %v327
        %v329 = vpop.xlane.xlu0 %328
        %vm330 = vcmp.eq.f32.partialorder %v297, %v329
        %v331 = vsel %vm330, -inf, %v323
        %332 = vmax.xlane.f32.xlu0 %v331
        %v333 = vpop.xlane.xlu0 %332
        %vm334 = vcmp.eq.f32.partialorder %v331, %v333
        %v335 = vsel %vm334, %v297, 128.0
        %336 = vmin.xlane.f32.xlu0 %v335
        %v337 = vpop.xlane.xlu0 %336
        %vm338 = vcmp.eq.f32.partialorder %v297, %v337
        %v339 = vsel %vm338, -inf, %v331
        %340 = vmax.xlane.f32.xlu0 %v339
        %v341 = vpop.xlane.xlu0 %340
        %vm342 = vcmp.eq.f32.partialorder %v339, %v341
        %v343 = vsel %vm342, %v297, 128.0
        %344 = vmin.xlane.f32.xlu0 %v343
        %v345 = vpop.xlane.xlu0 %344
        %vm346 = vcmp.eq.f32.partialorder %v297, %v345
        %v347 = vsel %vm346, -inf, %v339
        %348 = vmax.xlane.f32.xlu0 %v347
        %v349 = vpop.xlane.xlu0 %348
        %vm350 = vcmp.eq.f32.partialorder %v347, %v349
        %v351 = vsel %vm350, %v297, 128.0
        %352 = vmin.xlane.f32.xlu0 %v351
        %v353 = vpop.xlane.xlu0 %352
        %vm354 = vcmask 7168
        %v355 = vsel %vm354, %v309, %v317
        %vm356 = vcmask 15360
        %v357 = vsel %vm356, %v355, %v325
        %vm358 = vcmask 23552
        %v359 = vsel %vm358, %v357, %v333
        %vm360 = vcmask 31744
        %v361 = vsel %vm360, %v359, %v341
        %vm362 = vcmask 39936
        %v363 = vsel %vm362, %v361, %v349
        %vm364 = vcmask 48128
        %v365 = vsel %vm364, %v363, 0.0
        %v366 = vsel %vm354, %v313, %v321
        %v367 = vsel %vm356, %v366, %v329
        %v368 = vsel %vm358, %v367, %v337
        %v369 = vsel %vm360, %v368, %v345
        %v370 = vsel %vm362, %v369, %v353
        %v371 = vsel %vm364, %v370, 0.0
        %v372 = vrcp.pop %v306
        %v373 = vmul.f32 %v306, %v372
        %v374 = vsub.f32 1.0, %v373
        %v375 = vmul.f32 %v372, %v374
        %v376 = vadd.f32 %v372, %v375
        %vm377 = vweird.f32 %v306
        %vm378 = vweird.f32 %v372
        %vm379 = vmor %vm377, %vm378
        %v380 = vsel %vm379, %v372, %v376
        %v381 = vand.u32 2147483647, %v306
        %vm382 = vcmp.eq.f32.partialorder %v381, 8.507059e+37
        %v383 = vand.u32 %v306, 2147483648
        %v384 = vor.u32 1.1754944e-38, %v383
        %v385 = vsel %vm382, %v384, %v380
        %v386 = vmul.f32 %v365, %v385
        %387 = vst [vmem:[%s208] sm:$0xff] %v386
        %v388 = vcvt.f32.s32.to.zero.pseudo %v371
        %389 = vst [vmem:[%s215] sm:$0xff] %v388
        %s390 = sand.u32 %s80, 1
        %s391 = scalar_lea.sflag [#allocation4], %s390
        %s392 = sand.u32 %s80, 1
        %s393 = smul.addr %s392, 8
        %s394 = scalar_lea.vmem [#allocation7], %s393
        %s395 = sand.u32 %s106, 1
        %s396 = scalar_lea.sflag [#allocation9], %s395
        %s397 = sand.u32 %s106, 1
        %s398 = smul.addr %s397, 8
        %s399 = scalar_lea.vmem [#allocation8], %s398
        // Predicated region
        $region37: #{tpu_custom_call.1} parent=27 // pred_check
          %p400 = pneg %p90
        $region38: #{tpu_custom_call.1} parent=27 // pred_check_branch
          %402 = sbr.rel (%p400) target = $region40
        $region39: #{tpu_custom_call.1} parent=27 // pred_region
          %404 = vsyncadd %s391, 0
          %s405 = smul.addr %s25, 8
          %s406 = scalar_lea.hbm %s2, %s405
          %s408 = sshll.u32 %s394, 4
          %s409 = int_to_ptr.vmem [resolvable:$true] %s408
          %s410 = sshll.u32 %s406, 4
          %s411 = int_to_ptr.hbm [resolvable:$true] %s410
          %413 = dma.vmem_to_hbm [thread:$0]  %s409, 128, %s411, %s391
        $region40: #{tpu_custom_call.1} parent=27 // pred_fallthru
          _
        // Predicated region
        $region41: #{tpu_custom_call.1} parent=27 // pred_check
          %p414 = pneg %p116
        $region42: #{tpu_custom_call.1} parent=27 // pred_check_branch
          %416 = sbr.rel (%p414) target = $region44
        $region43: #{tpu_custom_call.1} parent=27 // pred_region
          %418 = vsyncadd %s396, 0
          %s419 = smul.addr %s25, 8
          %s420 = scalar_lea.hbm %s3, %s419
          %s422 = sshll.u32 %s399, 4
          %s423 = int_to_ptr.vmem [resolvable:$true] %s422
          %s424 = sshll.u32 %s420, 4
          %s425 = int_to_ptr.hbm [resolvable:$true] %s424
          %427 = dma.vmem_to_hbm [thread:$0]  %s423, 128, %s425, %s396
        $region44: #{tpu_custom_call.1} parent=27 // pred_fallthru
          _
      $region28: #{tpu_custom_call.1} parent=5 // pred_fallthru
        _
      %p428 = scmp.le.s32.totalorder 2, %s20
      // Predicated region
      $region45: #{tpu_custom_call.1} parent=5 // pred_check
        %p429 = pneg %p428
      $region46: #{tpu_custom_call.1} parent=5 // pred_check_branch
        %431 = sbr.rel (%p429) target = $region48
      $region47: #{tpu_custom_call.1} parent=5 // pred_region
        %s432 = ssub.s32 %s20, 2
        // Predicated region
        $region49: #{tpu_custom_call.1} parent=47 // pred_check
          %p433 = pneg %p96
        $region50: #{tpu_custom_call.1} parent=47 // pred_check_branch
          %435 = sbr.rel (%p433) target = $region52
        $region51: #{tpu_custom_call.1} parent=47 // pred_region
          %s436 = sand.u32 %s81, 1
          %s437 = scalar_lea.sflag [#allocation4], %s436
          %s438 = sand.u32 %s81, 1
          %s439 = smul.addr %s438, 8
          %s440 = scalar_lea.vmem [#allocation7], %s439
          %442 = dma.done %s437, 128
        $region52: #{tpu_custom_call.1} parent=47 // pred_fallthru
          _
        // Predicated region
        $region53: #{tpu_custom_call.1} parent=47 // pred_check
          %p443 = pneg %p122
        $region54: #{tpu_custom_call.1} parent=47 // pred_check_branch
          %445 = sbr.rel (%p443) target = $region56
        $region55: #{tpu_custom_call.1} parent=47 // pred_region
          %s446 = sand.u32 %s107, 1
          %s447 = scalar_lea.sflag [#allocation9], %s446
          %s448 = sand.u32 %s107, 1
          %s449 = smul.addr %s448, 8
          %s450 = scalar_lea.vmem [#allocation8], %s449
          %452 = dma.done %s447, 128
        $region56: #{tpu_custom_call.1} parent=47 // pred_fallthru
          _
      $region48: #{tpu_custom_call.1} parent=5 // pred_fallthru
        _
    $region6: #{tpu_custom_call.1} parent=1 // loop_footer
      %s24 = sadd.s32 1, %s20
    $region7: #{tpu_custom_call.1} parent=1 // loop_footer_branch
      %19 = sbr.rel target = $region3
    $region8: #{tpu_custom_call.1} parent=1 // loop_exit
      _
    %453 = vsyncpa [#allocation3], 1
    %s454 = scalar_lea.sflag [#allocation3], 1
    %455 = vsyncpa %s454, 1
    %456 = vsyncpa [#allocation6], 1
    %457 = vsyncpa [#allocation4], 1
    %s458 = scalar_lea.sflag [#allocation4], 1
    %459 = vsyncpa %s458, 1
    %460 = vsyncpa [#allocation9], 1
    %s461 = scalar_lea.sflag [#allocation9], 1
    %462 = vsyncpa %s461, 1

</llo_original>
